<compile_context>
chip_gen: v6e
topology: v6e:2x2x1
jax: 0.10.0
libtpu: 0.0.40
codegen_flags: <defaults>
</compile_context>

<pallas_src>
import jax
import jax.numpy as jnp
from jax.experimental import pallas as pl
from jax.experimental.pallas import tpu as pltpu

KH, KW = 3, 3  # conv kernel size (static)


def matmul_relu_kernel(x_ref, w_ref, o_ref):
    # x_ref: (TM, K_pad)        bf16 im2col rows (last padded column group holds
    #                           a 1.0 "bias tap" in column K)
    # w_ref: (K_pad, Cout_pad)  bf16 flattened conv weights, row K = bias
    # o_ref: (TM, Cout_pad)     f32 lane-dense output rows
    acc = jnp.dot(x_ref[...], w_ref[...], preferred_element_type=jnp.float32)
    o_ref[...] = jnp.maximum(acc, 0.0).astype(o_ref.dtype)


def conv3x3_relu(x_nchw, w_oihw, bias):
    """Forward pass of Net: ReLU(Conv2d(x)), stride=1, padding=1.

    x_nchw: (N, Cin, H, W) float32
    w_oihw: (Cout, Cin, 3, 3) float32
    bias:   (Cout,) float32
    returns (N, Cout, H, W) float32
    """
    N, Cin, H, W = x_nchw.shape
    Cout = w_oihw.shape[0]
    K = KH * KW * Cin          # 27
    K_eff = K + 1              # +1 column of ones carrying the bias
    K_pad = ((K_eff + 7) // 8) * 8          # 28 -> 32 (sublane-aligned)
    Cout_pad = ((Cout + 127) // 128) * 128  # 64 -> 128 (lane-dense stores)

    M = N * H * W
    # Two blocks when M is large enough: megacore-friendly on v7x (one block
    # per TC), negligible extra per-step overhead on single-TC v5e/v6e.
    TM = 256 if M > 256 else ((M + 7) // 8) * 8
    grid_m = pl.cdiv(M, TM)
    M_pad = grid_m * TM

    # --- wrapper-side layout work (tiny data, fused by XLA) -----------------
    # NCHW -> NHWC, zero-pad spatial dims by 1 (padding=1).
    x_nhwc = jnp.transpose(x_nchw, (0, 2, 3, 1))
    x_padded = jnp.pad(x_nhwc, ((0, 0), (1, 1), (1, 1), (0, 0)))

    # im2col: (N, H, W, KH*KW*Cin) with K ordered (kh, kw, cin), plus a ones
    # column so the bias rides the MXU for free.
    taps = [x_padded[:, kh:kh + H, kw:kw + W, :]
            for kh in range(KH) for kw in range(KW)]
    taps.append(jnp.ones((N, H, W, 1), dtype=x_nchw.dtype))
    patches = jnp.concatenate(taps, axis=-1).reshape(M, K_eff)
    x_mat = jnp.pad(patches, ((0, M_pad - M), (0, K_pad - K_eff)))
    x_mat = x_mat.astype(jnp.bfloat16)

    # Weights: OIHW -> HWIO -> (K, Cout); append bias as row K; zero-pad.
    w_mat = jnp.transpose(w_oihw, (2, 3, 1, 0)).reshape(K, Cout)
    w_full = jnp.concatenate([w_mat, bias[None, :]], axis=0)  # (K_eff, Cout)
    w_pad = jnp.pad(w_full, ((0, K_pad - K_eff), (0, Cout_pad - Cout)))
    w_pad = w_pad.astype(jnp.bfloat16)

    # --- single lane-dense matmul kernel ------------------------------------
    out = pl.pallas_call(
        matmul_relu_kernel,
        out_shape=jax.ShapeDtypeStruct((M_pad, Cout_pad), jnp.float32),
        grid_spec=pltpu.PrefetchScalarGridSpec(
            num_scalar_prefetch=0,
            grid=(grid_m,),
            in_specs=[
                pl.BlockSpec((TM, K_pad), lambda i: (i, 0)),
                pl.BlockSpec((K_pad, Cout_pad), lambda i: (0, 0)),
            ],
            out_specs=pl.BlockSpec((TM, Cout_pad), lambda i: (i, 0)),
        ),
        compiler_params=pltpu.CompilerParams(
            dimension_semantics=("parallel",),
        ),
    )(x_mat, w_pad)

    # Drop M/Cout padding, restore NCHW to match the PyTorch module exactly.
    # TODO(synk): if the surrounding model used NHWC end-to-end, the transpose
    # pair here could be dropped entirely.
    out = out[:M, :Cout].reshape(N, H, W, Cout)
    return jnp.transpose(out, (0, 3, 1, 2))


if __name__ == "__main__":
    key = jax.random.PRNGKey(0)
    kx, kw, kb = jax.random.split(key, 3)

    N, Cin, H, W = 2, 3, 16, 16
    Cout = 64

    x = jax.random.normal(kx, (N, Cin, H, W), dtype=jnp.float32)
    # Deterministic synthetic parameters (same shapes as nn.Conv2d(3, 64, 3)).
    fan_in = Cin * KH * KW
    bound = 1.0 / (fan_in ** 0.5)
    weight = jax.random.uniform(kw, (Cout, Cin, KH, KW),
                                minval=-bound, maxval=bound, dtype=jnp.float32)
    bias = jax.random.uniform(kb, (Cout,),
                              minval=-bound, maxval=bound, dtype=jnp.float32)

    out = conv3x3_relu(x, weight, bias)
    out = jax.block_until_ready(out)

    # Sanity-check against the pure-JAX reference conv + ReLU (f32).
    ref = jax.lax.conv_general_dilated(
        x, weight, window_strides=(1, 1), padding=((1, 1), (1, 1)),
        dimension_numbers=("NCHW", "OIHW", "NCHW"),
    ) + bias[None, :, None, None]
    ref = jnp.maximum(ref, 0.0)
    assert out.shape == (N, Cout, H, W)
    # bf16 operands / f32 accumulation -> loosened tolerance vs f32 reference.
    assert jnp.allclose(out, ref, atol=2e-2, rtol=2e-2)

    print("KERNEL_OK")
</pallas_src>

<mosaic_0001>
module attributes {stable_mosaic.version = 11 : i64} {
  func.func @matmul_relu_kernel(%arg0: i32, %arg1: memref<256x32xbf16, #tpu.memory_space<vmem>>, %arg2: memref<32x128xbf16, #tpu.memory_space<vmem>>, %arg3: memref<256x128xf32, #tpu.memory_space<vmem>>) attributes {dimension_semantics = [#tpu.dimension_semantics<parallel>], iteration_bounds = array<i64: 2>, scalar_prefetch = 0 : i64, scratch_operands = 0 : i64, tpu.core_type = #tpu.core_type<tc>, window_params = [{transform_indices = @transform_0, window_bounds = array<i64: 256, 32>}, {pipeline_mode = #tpu.pipeline_mode<synchronous>, transform_indices = @transform_1, window_bounds = array<i64: 32, 128>}, {transform_indices = @transform_2, window_bounds = array<i64: 256, 128>}]} {
    %c0 = arith.constant 0 : index
    %c0_0 = arith.constant 0 : index
    %0 = vector.load %arg1[%c0, %c0_0] : memref<256x32xbf16, #tpu.memory_space<vmem>>, vector<256x32xbf16>
    %c0_1 = arith.constant 0 : index
    %c0_2 = arith.constant 0 : index
    %1 = vector.load %arg2[%c0_1, %c0_2] : memref<32x128xbf16, #tpu.memory_space<vmem>>, vector<32x128xbf16>
    %cst = arith.constant dense<0.000000e+00> : vector<256x128xf32>
    %2 = tpu.matmul %0, %1, %cst {dimension_numbers = #tpu.dot_dimension_numbers<[1], [0], [0], [1], [0, 0, 1, 1], [], []>} : vector<256x32xbf16>, vector<32x128xbf16>, vector<256x128xf32> -> vector<256x128xf32>
    %cst_3 = arith.constant 0.000000e+00 : f32
    %3 = vector.broadcast %cst_3 : f32 to vector<256x128xf32>
    %4 = arith.maximumf %2, %3 : vector<256x128xf32>
    %c0_4 = arith.constant 0 : index
    %c0_5 = arith.constant 0 : index
    %5 = vector.load %arg3[%c0_4, %c0_5] : memref<256x128xf32, #tpu.memory_space<vmem>>, vector<256x128xf32>
    tpu.vector_store %arg3[%c0_4, %c0_5], %4 {strides = array<i32>} : memref<256x128xf32, #tpu.memory_space<vmem>>, vector<256x128xf32>,
    return
  }
  func.func @transform_0(%arg0: i32) -> (i32, i32) {
    %c0_i32 = arith.constant 0 : i32
    %c0_i32_0 = arith.constant 0 : i32
    return %arg0, %c0_i32 : i32, i32
  }
  func.func @transform_1(%arg0: i32) -> (i32, i32) {
    %c0_i32 = arith.constant 0 : i32
    %c0_i32_0 = arith.constant 0 : i32
    %c0_i32_1 = arith.constant 0 : i32
    return %c0_i32, %c0_i32_0 : i32, i32
  }
  func.func @transform_2(%arg0: i32) -> (i32, i32) {
    %c0_i32 = arith.constant 0 : i32
    %c0_i32_0 = arith.constant 0 : i32
    return %arg0, %c0_i32 : i32, i32
  }
}

</mosaic_0001>

<llo_original>
// kernel: tpu_custom_call.1
$region0: #{tpu_custom_call.1}
  #allocation0 [shape = 'u32[]', space=smem, size = 0x4, offset = 0x4, fixed_abs, tag = 'smem constant byte address 0x4 - core index']
  #allocation1 [shape = 'u32[144,128]{1,0:T(1,128)}', space=vmem, size = 0x12000, scoped, tag = 'internal scratch']
  %s0 = inlined_call_operand.vmem [shape: bf16[512,32], index: 0, kind: input, shape index: {}]
  %s1 = inlined_call_operand.vmem [shape: bf16[32,128], index: 1, kind: input, shape index: {}]
  %s2 = inlined_call_operand.hbm [shape: f32[512,128], index: 2, kind: output, shape index: {}]
  %s3 = sld [smem:[#allocation0]]
  $region41: #{tpu_custom_call.1} parent=0
    _
  %s5 = ssub.s32 1, %s3
  %s6 = scalar_select 0, %s5, %s3
  $region1: #{tpu_custom_call.1} parent=0
    #allocation2 [shape = 'u8[262144]{0}', space=vmem, size = 0x40000, scoped, tag = 'output window, operand 0']
    #allocation3 [shape = 's32[2]{0}', space=sflag, size = 0x8, scoped, tag = 'scoped memory for tpu_custom_call.1']
    %7 = vsyncpa [#allocation3], 0
    %s8 = scalar_lea.sflag [#allocation3], 1
    %9 = vsyncpa %s8, 0
    loop: start=0, step=1, limit=4
    $region2: #{tpu_custom_call.1} parent=1 // loop_pre_header
      _
    $region3: #{tpu_custom_call.1} parent=1 // loop_header
      %s11 = sphi 0, %s15
      %p12 = scmp.ge.s32.totalorder %s11, 4
      %s21 = sphi 0, %s23
      %s24 = sphi 0, %s21
      %s25 = sphi 0, %s24
      %s41 = sphi 0, %s25
      %s45 = sphi 0, %s45
      %s47 = sphi 0, %s45
      %s48 = sphi 0, %s47
      %s62 = sphi 0, %s48
      %s68 = sphi 0, %s70
      %s71 = sphi 0, %s68
      %s72 = sphi 0, %s71
      %s88 = sphi 0, %s72
    $region4: #{tpu_custom_call.1} parent=1 // loop_header_branch
      %14 = sbr.rel (%p12) target = $region8
    $region5: #{tpu_custom_call.1} parent=1 // loop_body
      %s16 = ssub.s32 %s11, 1
      %s17 = ssub.s32 %s11, 2
      %s18 = sadd.s32 %s11, 1
      %s19 = ssub.s32 %s11, %s18
      %p20 = scmp.eq.s32.totalorder %s19, 0
      %s22 = sadd.s32 %s21, 1
      %s23 = scalar_select %p20, %s21, %s22
      %p26 = pneg %p20
      %p27 = scmp.eq.s32.totalorder %s11, 1
      %p28 = por %p26, %p27
      %p29 = scmp.ne.s32.totalorder %s21, %s24
      %p30 = scmp.eq.s32.totalorder %s11, 0
      %p31 = por %p29, %p30
      %p32 = scmp.ne.s32.totalorder %s21, %s24
      %p33 = scmp.eq.s32.totalorder %s16, 1
      %p34 = por %p32, %p33
      %p35 = scmp.ne.s32.totalorder %s24, %s25
      %p36 = scmp.eq.s32.totalorder %s16, 0
      %p37 = por %p35, %p36
      %p38 = scmp.ne.s32.totalorder %s24, %s25
      %p39 = scmp.eq.s32.totalorder %s17, 1
      %p40 = por %p38, %p39
      %p42 = scmp.ne.s32.totalorder %s25, %s41
      %p43 = scmp.eq.s32.totalorder %s17, 0
      %p44 = por %p42, %p43
      %s46 = sadd.s32 %s45, 1
      %p49 = scmp.eq.s32.totalorder %s11, 1
      %p50 = scmp.ne.s32.totalorder %s45, %s47
      %p51 = scmp.eq.s32.totalorder %s11, 0
      %p52 = por %p50, %p51
      %p53 = scmp.ne.s32.totalorder %s45, %s47
      %p54 = scmp.eq.s32.totalorder %s16, 1
      %p55 = por %p53, %p54
      %p56 = scmp.ne.s32.totalorder %s47, %s48
      %p57 = scmp.eq.s32.totalorder %s16, 0
      %p58 = por %p56, %p57
      %p59 = scmp.ne.s32.totalorder %s47, %s48
      %p60 = scmp.eq.s32.totalorder %s17, 1
      %p61 = por %p59, %p60
      %p63 = scmp.ne.s32.totalorder %s48, %s62
      %p64 = scmp.eq.s32.totalorder %s17, 0
      %p65 = por %p63, %p64
      %s66 = ssub.s32 %s11, %s18
      %p67 = scmp.eq.s32.totalorder %s66, 0
      %s69 = sadd.s32 %s68, 1
      %s70 = scalar_select %p67, %s68, %s69
      %p73 = pneg %p67
      %p74 = scmp.eq.s32.totalorder %s11, 1
      %p75 = por %p73, %p74
      %p76 = scmp.ne.s32.totalorder %s68, %s71
      %p77 = scmp.eq.s32.totalorder %s11, 0
      %p78 = por %p76, %p77
      %p79 = scmp.ne.s32.totalorder %s68, %s71
      %p80 = scmp.eq.s32.totalorder %s16, 1
      %p81 = por %p79, %p80
      %p82 = scmp.ne.s32.totalorder %s71, %s72
      %p83 = scmp.eq.s32.totalorder %s16, 0
      %p84 = por %p82, %p83
      %p85 = scmp.ne.s32.totalorder %s71, %s72
      %p86 = scmp.eq.s32.totalorder %s17, 1
      %p87 = por %p85, %p86
      %p89 = scmp.ne.s32.totalorder %s72, %s88
      %p90 = scmp.eq.s32.totalorder %s17, 0
      %p91 = por %p89, %p90
      %p92 = scmp.le.s32.totalorder 1, %s11
      %p93 = scmp.lt.s32.totalorder %s11, 3
      %p94 = pnand %p92, %p93
      %p95 = pneg %p94
      // Predicated region
      $region9: #{tpu_custom_call.1} parent=5 // pred_check
        _
      $region10: #{tpu_custom_call.1} parent=5 // pred_check_branch
        %97 = sbr.rel (%p94) target = $region12
      $region11: #{tpu_custom_call.1} parent=5 // pred_region
        %s98 = ssub.s32 %s11, 1
        // Predicated region
        $region13: #{tpu_custom_call.1} parent=11 // pred_check
          %p99 = pneg %p58
        $region14: #{tpu_custom_call.1} parent=11 // pred_check_branch
          %101 = sbr.rel (%p99) target = $region16
        $region15: #{tpu_custom_call.1} parent=11 // pred_region
          _
        $region16: #{tpu_custom_call.1} parent=11 // pred_fallthru
          _
      $region12: #{tpu_custom_call.1} parent=5 // pred_fallthru
        _
      %p102 = scmp.lt.s32.totalorder %s11, 2
      // Predicated region
      $region17: #{tpu_custom_call.1} parent=5 // pred_check
        %p103 = pneg %p102
      $region18: #{tpu_custom_call.1} parent=5 // pred_check_branch
        %105 = sbr.rel (%p103) target = $region20
      $region19: #{tpu_custom_call.1} parent=5 // pred_region
        // Predicated region
        $region21: #{tpu_custom_call.1} parent=19 // pred_check
          %p106 = pneg %p31
        $region22: #{tpu_custom_call.1} parent=19 // pred_check_branch
          %108 = sbr.rel (%p106) target = $region24
        $region23: #{tpu_custom_call.1} parent=19 // pred_region
          %s109 = smul.u32 32, %s11
          %p110 = scmp.lt.s32.totalorder %s109, 63
          %s111 = scalar_select %p110, %s109, 63
          %s112 = smul.addr %s111, 4
          %s113 = scalar_lea.vmem %s0, %s112
          %s114 = smul.u32 32, %s11
        $region24: #{tpu_custom_call.1} parent=19 // pred_fallthru
          _
      $region20: #{tpu_custom_call.1} parent=5 // pred_fallthru
        _
      %p115 = scmp.le.s32.totalorder 1, %s11
      %p116 = scmp.lt.s32.totalorder %s11, 3
      %p117 = pnand %p115, %p116
      %p118 = pneg %p117
      // Predicated region
      $region25: #{tpu_custom_call.1} parent=5 // pred_check
        _
      $region26: #{tpu_custom_call.1} parent=5 // pred_check_branch
        %120 = sbr.rel (%p117) target = $region28
      $region27: #{tpu_custom_call.1} parent=5 // pred_region
        %s121 = ssub.s32 %s11, 1
        %s122 = smul.u32 32, %s16
        %p123 = scmp.lt.s32.totalorder %s122, 63
        %s124 = scalar_select %p123, %s122, 63
        %s125 = smul.addr %s124, 4
        %s126 = scalar_lea.vmem %s0, %s125
        %p127 = pneg %p37
        %p128 = pneg %p34
        %p129 = pneg %p58
        %p130 = pneg %p55
        %p131 = pneg %p84
        %p132 = pneg %p81
        %s133 = sand.u32 %s71, 1
        %s134 = scalar_lea.sflag [#allocation3], %s133
        %s135 = sand.u32 %s71, 1
        %s136 = smul.addr %s135, 256
        %s137 = scalar_lea.vmem [#allocation2], %s136
        %s138 = smul.u32 32, %s16
        %p139 = scmp.lt.s32.totalorder %s138, 63
        %s140 = scalar_select %p139, %s138, 63
        %s141 = smul.addr %s140, 4
        %s142 = scalar_lea.vmem %s0, %s141
        %s143 = smul.u32 32, %s16
        %s144 = smul.u32 32, %s16
        %v146 = vld [vmem:[%s142] sm:$0xf]
        %v147 = vld [vmem:[%s142 + $0x4] sm:$0xf]
        %v148 = vld [vmem:[%s142 + $0x8] sm:$0xf]
        %v149 = vld [vmem:[%s142 + $0xc] sm:$0xf]
        %v150 = vld [vmem:[%s142 + $0x10] sm:$0xf]
        %v151 = vld [vmem:[%s142 + $0x14] sm:$0xf]
        %v152 = vld [vmem:[%s142 + $0x18] sm:$0xf]
        %v153 = vld [vmem:[%s142 + $0x1c] sm:$0xf]
        %v154 = vld [vmem:[%s142 + $0x20] sm:$0xf]
        %v155 = vld [vmem:[%s142 + $0x24] sm:$0xf]
        %v156 = vld [vmem:[%s142 + $0x28] sm:$0xf]
        %v157 = vld [vmem:[%s142 + $0x2c] sm:$0xf]
        %v158 = vld [vmem:[%s142 + $0x30] sm:$0xf]
        %v159 = vld [vmem:[%s142 + $0x34] sm:$0xf]
        %v160 = vld [vmem:[%s142 + $0x38] sm:$0xf]
        %v161 = vld [vmem:[%s142 + $0x3c] sm:$0xf]
        %v162 = vld [vmem:[%s142 + $0x40] sm:$0xf]
        %v163 = vld [vmem:[%s142 + $0x44] sm:$0xf]
        %v164 = vld [vmem:[%s142 + $0x48] sm:$0xf]
        %v165 = vld [vmem:[%s142 + $0x4c] sm:$0xf]
        %v166 = vld [vmem:[%s142 + $0x50] sm:$0xf]
        %v167 = vld [vmem:[%s142 + $0x54] sm:$0xf]
        %v168 = vld [vmem:[%s142 + $0x58] sm:$0xf]
        %v169 = vld [vmem:[%s142 + $0x5c] sm:$0xf]
        %v170 = vld [vmem:[%s142 + $0x60] sm:$0xf]
        %v171 = vld [vmem:[%s142 + $0x64] sm:$0xf]
        %v172 = vld [vmem:[%s142 + $0x68] sm:$0xf]
        %v173 = vld [vmem:[%s142 + $0x6c] sm:$0xf]
        %v174 = vld [vmem:[%s142 + $0x70] sm:$0xf]
        %v175 = vld [vmem:[%s142 + $0x74] sm:$0xf]
        %v176 = vld [vmem:[%s142 + $0x78] sm:$0xf]
        %v177 = vld [vmem:[%s142 + $0x7c] sm:$0xf]
        %v178 = vld [vmem:[%s1] sm:$0xf]
        %v179 = vld [vmem:[%s1 + $0x4] sm:$0xf]
        %v180 = vld [vmem:[%s1 + $0x8] sm:$0xf]
        %v181 = vld [vmem:[%s1 + $0xc] sm:$0xf]
        %v214 = vunpack.c.l.b16 %v146
        %v215 = vunpack.c.l.b16 %v147
        %v216 = vunpack.c.l.b16 %v148
        %v217 = vunpack.c.l.b16 %v149
        %v218 = vunpack.c.l.b16 %v150
        %v219 = vunpack.c.l.b16 %v151
        %v220 = vunpack.c.l.b16 %v152
        %v221 = vunpack.c.l.b16 %v153
        %v222 = vunpack.c.l.b16 %v154
        %v223 = vunpack.c.l.b16 %v155
        %v224 = vunpack.c.l.b16 %v156
        %v225 = vunpack.c.l.b16 %v157
        %v226 = vunpack.c.l.b16 %v158
        %v227 = vunpack.c.l.b16 %v159
        %v228 = vunpack.c.l.b16 %v160
        %v229 = vunpack.c.l.b16 %v161
        %v230 = vunpack.c.l.b16 %v162
        %v231 = vunpack.c.l.b16 %v163
        %v232 = vunpack.c.l.b16 %v164
        %v233 = vunpack.c.l.b16 %v165
        %v234 = vunpack.c.l.b16 %v166
        %v235 = vunpack.c.l.b16 %v167
        %v236 = vunpack.c.l.b16 %v168
        %v237 = vunpack.c.l.b16 %v169
        %v238 = vunpack.c.l.b16 %v170
        %v239 = vunpack.c.l.b16 %v171
        %v240 = vunpack.c.l.b16 %v172
        %v241 = vunpack.c.l.b16 %v173
        %v242 = vunpack.c.l.b16 %v174
        %v243 = vunpack.c.l.b16 %v175
        %v244 = vunpack.c.l.b16 %v176
        %v245 = vunpack.c.l.b16 %v177
        %v246 = vpack.c.b16 %v215, %v214
        %v247 = vpack.c.b16 %v217, %v216
        %v248 = vpack.c.b16 %v219, %v218
        %v249 = vpack.c.b16 %v221, %v220
        %v250 = vpack.c.b16 %v223, %v222
        %v251 = vpack.c.b16 %v225, %v224
        %v252 = vpack.c.b16 %v227, %v226
        %v253 = vpack.c.b16 %v229, %v228
        %v254 = vpack.c.b16 %v231, %v230
        %v255 = vpack.c.b16 %v233, %v232
        %v256 = vpack.c.b16 %v235, %v234
        %v257 = vpack.c.b16 %v237, %v236
        %v258 = vpack.c.b16 %v239, %v238
        %v259 = vpack.c.b16 %v241, %v240
        %v260 = vpack.c.b16 %v243, %v242
        %v261 = vpack.c.b16 %v245, %v244
        %v266 = vunpack.c.l.b16 %v178
        %v267 = vunpack.c.l.b16 %v179
        %v268 = vunpack.c.l.b16 %v180
        %v269 = vunpack.c.l.b16 %v181
        %v270 = vpack.c.b16 %v267, %v266
        %v271 = vpack.c.b16 %v269, %v268
        %vm274 = vcmask 261120
        %v276 = vsel %vm274, %v246, 0
        %v279 = vsel %vm274, %v247, 0
        %v282 = vsel %vm274, %v248, 0
        %v285 = vsel %vm274, %v249, 0
        %v288 = vsel %vm274, %v250, 0
        %v291 = vsel %vm274, %v251, 0
        %v294 = vsel %vm274, %v252, 0
        %v297 = vsel %vm274, %v253, 0
        %v300 = vsel %vm274, %v254, 0
        %v303 = vsel %vm274, %v255, 0
        %v306 = vsel %vm274, %v256, 0
        %v309 = vsel %vm274, %v257, 0
        %v312 = vsel %vm274, %v258, 0
        %v315 = vsel %vm274, %v259, 0
        %v318 = vsel %vm274, %v260, 0
        %v321 = vsel %vm274, %v261, 0
        %323 = vmatprep.subr.bf16.mxu0 0
        %324 = vmatpush1.bf16.msra.mxu0 0
        %325 = vmatprep.subr.bf16.mxu0 0
        %326 = vmatpush1.bf16.msra.mxu0 0
        %327 = vmatprep.subr.bf16.mxu0 0
        %328 = vmatpush1.bf16.msra.mxu0 0
        %329 = vmatprep.subr.bf16.mxu0 0
        %330 = vmatpush1.bf16.msra.mxu0 0
        %331 = vmatprep.subr.bf16.mxu0 0
        %332 = vmatpush1.bf16.msra.mxu0 0
        %333 = vmatprep.subr.bf16.mxu0 0
        %334 = vmatpush1.bf16.msra.mxu0 0
        %335 = vmatprep.subr.bf16.mxu0 0
        %336 = vmatpush1.bf16.msra.mxu0 %v271
        %337 = vmatprep.subr.bf16.mxu0 0
        %338 = vmatpush1.bf16.msra.mxu0 %v270
        %339 = vmatprep.subr.bf16.mxu0 0
        %340 = vmatpush2.bf16.msra.mxu0 0
        %341 = vmatprep.subr.bf16.mxu0 0
        %342 = vmatpush2.bf16.msra.mxu0 0
        %343 = vmatprep.subr.bf16.mxu0 0
        %344 = vmatpush2.bf16.msra.mxu0 0
        %345 = vmatprep.subr.bf16.mxu0 0
        %346 = vmatpush2.bf16.msra.mxu0 0
        %347 = vmatprep.subr.bf16.mxu0 0
        %348 = vmatpush2.bf16.msra.mxu0 0
        %349 = vmatprep.subr.bf16.mxu0 0
        %350 = vmatpush2.bf16.msra.mxu0 0
        %351 = vmatprep.subr.bf16.mxu0 0
        %352 = vmatpush2.bf16.msra.mxu0 0
        %353 = vmatprep.subr.bf16.mxu0 0
        %354 = vmatpush2.bf16.msra.mxu0 0
        %355 = vmatprep.mubr.bf16.mxu0 0
        %356 = vmatmul.mubr.bf16.gmra.mxu0 %v276
        %v357 = vpop.f32.mrf.mxu0
        %v358 = vadd.f32 0.0, %v357
        %v359 = vpop.f32.mrf.mxu0
        %v360 = vpop.f32.mrf.mxu0
        %v361 = vadd.f32 0.0, %v360
        %v362 = vpop.f32.mrf.mxu0
        %363 = vmatprep.mubr.bf16.mxu0 0
        %364 = vmatmul.mubr.bf16.gmra.mxu0 %v279
        %v365 = vpop.f32.mrf.mxu0
        %v366 = vadd.f32 0.0, %v365
        %v367 = vpop.f32.mrf.mxu0
        %v368 = vpop.f32.mrf.mxu0
        %v369 = vadd.f32 0.0, %v368
        %v370 = vpop.f32.mrf.mxu0
        %371 = vmatprep.mubr.bf16.mxu0 0
        %372 = vmatmul.mubr.bf16.gmra.mxu0 %v282
        %v373 = vpop.f32.mrf.mxu0
        %v374 = vadd.f32 0.0, %v373
        %v375 = vpop.f32.mrf.mxu0
        %v376 = vpop.f32.mrf.mxu0
        %v377 = vadd.f32 0.0, %v376
        %v378 = vpop.f32.mrf.mxu0
        %379 = vmatprep.mubr.bf16.mxu0 0
        %380 = vmatmul.mubr.bf16.gmra.mxu0 %v285
        %v381 = vpop.f32.mrf.mxu0
        %v382 = vadd.f32 0.0, %v381
        %v383 = vpop.f32.mrf.mxu0
        %v384 = vpop.f32.mrf.mxu0
        %v385 = vadd.f32 0.0, %v384
        %v386 = vpop.f32.mrf.mxu0
        %387 = vmatprep.mubr.bf16.mxu0 0
        %388 = vmatmul.mubr.bf16.gmra.mxu0 %v288
        %v389 = vpop.f32.mrf.mxu0
        %v390 = vadd.f32 0.0, %v389
        %v391 = vpop.f32.mrf.mxu0
        %v392 = vpop.f32.mrf.mxu0
        %v393 = vadd.f32 0.0, %v392
        %v394 = vpop.f32.mrf.mxu0
        %395 = vmatprep.mubr.bf16.mxu0 0
        %396 = vmatmul.mubr.bf16.gmra.mxu0 %v291
        %v397 = vpop.f32.mrf.mxu0
        %v398 = vadd.f32 0.0, %v397
        %v399 = vpop.f32.mrf.mxu0
        %v400 = vpop.f32.mrf.mxu0
        %v401 = vadd.f32 0.0, %v400
        %v402 = vpop.f32.mrf.mxu0
        %403 = vmatprep.mubr.bf16.mxu0 0
        %404 = vmatmul.mubr.bf16.gmra.mxu0 %v294
        %v405 = vpop.f32.mrf.mxu0
        %v406 = vadd.f32 0.0, %v405
        %v407 = vpop.f32.mrf.mxu0
        %v408 = vpop.f32.mrf.mxu0
        %v409 = vadd.f32 0.0, %v408
        %v410 = vpop.f32.mrf.mxu0
        %411 = vmatprep.mubr.bf16.mxu0 0
        %412 = vmatmul.mubr.bf16.gmra.mxu0 %v297
        %v413 = vpop.f32.mrf.mxu0
        %v414 = vadd.f32 0.0, %v413
        %v415 = vpop.f32.mrf.mxu0
        %v416 = vpop.f32.mrf.mxu0
        %v417 = vadd.f32 0.0, %v416
        %v418 = vpop.f32.mrf.mxu0
        %419 = vmatprep.mubr.bf16.mxu0 0
        %420 = vmatmul.mubr.bf16.gmra.mxu0 %v300
        %v421 = vpop.f32.mrf.mxu0
        %v422 = vadd.f32 0.0, %v421
        %v423 = vpop.f32.mrf.mxu0
        %v424 = vpop.f32.mrf.mxu0
        %v425 = vadd.f32 0.0, %v424
        %v426 = vpop.f32.mrf.mxu0
        %427 = vmatprep.mubr.bf16.mxu0 0
        %428 = vmatmul.mubr.bf16.gmra.mxu0 %v303
        %v429 = vpop.f32.mrf.mxu0
        %v430 = vadd.f32 0.0, %v429
        %v431 = vpop.f32.mrf.mxu0
        %v432 = vpop.f32.mrf.mxu0
        %v433 = vadd.f32 0.0, %v432
        %v434 = vpop.f32.mrf.mxu0
        %435 = vmatprep.mubr.bf16.mxu0 0
        %436 = vmatmul.mubr.bf16.gmra.mxu0 %v306
        %v437 = vpop.f32.mrf.mxu0
        %v438 = vadd.f32 0.0, %v437
        %v439 = vpop.f32.mrf.mxu0
        %v440 = vpop.f32.mrf.mxu0
        %v441 = vadd.f32 0.0, %v440
        %v442 = vpop.f32.mrf.mxu0
        %443 = vmatprep.mubr.bf16.mxu0 0
        %444 = vmatmul.mubr.bf16.gmra.mxu0 %v309
        %v445 = vpop.f32.mrf.mxu0
        %v446 = vadd.f32 0.0, %v445
        %v447 = vpop.f32.mrf.mxu0
        %v448 = vpop.f32.mrf.mxu0
        %v449 = vadd.f32 0.0, %v448
        %v450 = vpop.f32.mrf.mxu0
        %451 = vmatprep.mubr.bf16.mxu0 0
        %452 = vmatmul.mubr.bf16.gmra.mxu0 %v312
        %v453 = vpop.f32.mrf.mxu0
        %v454 = vadd.f32 0.0, %v453
        %v455 = vpop.f32.mrf.mxu0
        %v456 = vpop.f32.mrf.mxu0
        %v457 = vadd.f32 0.0, %v456
        %v458 = vpop.f32.mrf.mxu0
        %459 = vmatprep.mubr.bf16.mxu0 0
        %460 = vmatmul.mubr.bf16.gmra.mxu0 %v315
        %v461 = vpop.f32.mrf.mxu0
        %v462 = vadd.f32 0.0, %v461
        %v463 = vpop.f32.mrf.mxu0
        %v464 = vpop.f32.mrf.mxu0
        %v465 = vadd.f32 0.0, %v464
        %v466 = vpop.f32.mrf.mxu0
        %467 = vmatprep.mubr.bf16.mxu0 0
        %468 = vmatmul.mubr.bf16.gmra.mxu0 %v318
        %v469 = vpop.f32.mrf.mxu0
        %v470 = vadd.f32 0.0, %v469
        %v471 = vpop.f32.mrf.mxu0
        %v472 = vpop.f32.mrf.mxu0
        %v473 = vadd.f32 0.0, %v472
        %v474 = vpop.f32.mrf.mxu0
        %475 = vmatprep.mubr.bf16.mxu0 0
        %476 = vmatmul.mubr.bf16.gmra.mxu0 %v321
        %v477 = vpop.f32.mrf.mxu0
        %v478 = vadd.f32 0.0, %v477
        %v479 = vpop.f32.mrf.mxu0
        %v480 = vpop.f32.mrf.mxu0
        %v481 = vadd.f32 0.0, %v480
        %v482 = vpop.f32.mrf.mxu0
        %483 = vdwg.mxu0
        %v484 = vmax.f32 %v358, 0.0
        %v485 = vmax.f32 %v361, 0.0
        %v486 = vmax.f32 %v366, 0.0
        %v487 = vmax.f32 %v369, 0.0
        %v488 = vmax.f32 %v374, 0.0
        %v489 = vmax.f32 %v377, 0.0
        %v490 = vmax.f32 %v382, 0.0
        %v491 = vmax.f32 %v385, 0.0
        %v492 = vmax.f32 %v390, 0.0
        %v493 = vmax.f32 %v393, 0.0
        %v494 = vmax.f32 %v398, 0.0
        %v495 = vmax.f32 %v401, 0.0
        %v496 = vmax.f32 %v406, 0.0
        %v497 = vmax.f32 %v409, 0.0
        %v498 = vmax.f32 %v414, 0.0
        %v499 = vmax.f32 %v417, 0.0
        %v500 = vmax.f32 %v422, 0.0
        %v501 = vmax.f32 %v425, 0.0
        %v502 = vmax.f32 %v430, 0.0
        %v503 = vmax.f32 %v433, 0.0
        %v504 = vmax.f32 %v438, 0.0
        %v505 = vmax.f32 %v441, 0.0
        %v506 = vmax.f32 %v446, 0.0
        %v507 = vmax.f32 %v449, 0.0
        %v508 = vmax.f32 %v454, 0.0
        %v509 = vmax.f32 %v457, 0.0
        %v510 = vmax.f32 %v462, 0.0
        %v511 = vmax.f32 %v465, 0.0
        %v512 = vmax.f32 %v470, 0.0
        %v513 = vmax.f32 %v473, 0.0
        %v514 = vmax.f32 %v478, 0.0
        %v515 = vmax.f32 %v481, 0.0
        %516 = vst [vmem:[%s137] sm:$0xff] %v484
        %517 = vst [vmem:[%s137 + $0x8] sm:$0xff] %v485
        %518 = vst [vmem:[%s137 + $0x10] sm:$0xff] %v486
        %519 = vst [vmem:[%s137 + $0x18] sm:$0xff] %v487
        %520 = vst [vmem:[%s137 + $0x20] sm:$0xff] %v488
        %521 = vst [vmem:[%s137 + $0x28] sm:$0xff] %v489
        %522 = vst [vmem:[%s137 + $0x30] sm:$0xff] %v490
        %523 = vst [vmem:[%s137 + $0x38] sm:$0xff] %v491
        %524 = vst [vmem:[%s137 + $0x40] sm:$0xff] %v492
        %525 = vst [vmem:[%s137 + $0x48] sm:$0xff] %v493
        %526 = vst [vmem:[%s137 + $0x50] sm:$0xff] %v494
        %527 = vst [vmem:[%s137 + $0x58] sm:$0xff] %v495
        %528 = vst [vmem:[%s137 + $0x60] sm:$0xff] %v496
        %529 = vst [vmem:[%s137 + $0x68] sm:$0xff] %v497
        %530 = vst [vmem:[%s137 + $0x70] sm:$0xff] %v498
        %531 = vst [vmem:[%s137 + $0x78] sm:$0xff] %v499
        %532 = vst [vmem:[%s137 + $0x80] sm:$0xff] %v500
        %533 = vst [vmem:[%s137 + $0x88] sm:$0xff] %v501
        %534 = vst [vmem:[%s137 + $0x90] sm:$0xff] %v502
        %535 = vst [vmem:[%s137 + $0x98] sm:$0xff] %v503
        %536 = vst [vmem:[%s137 + $0xa0] sm:$0xff] %v504
        %537 = vst [vmem:[%s137 + $0xa8] sm:$0xff] %v505
        %538 = vst [vmem:[%s137 + $0xb0] sm:$0xff] %v506
        %539 = vst [vmem:[%s137 + $0xb8] sm:$0xff] %v507
        %540 = vst [vmem:[%s137 + $0xc0] sm:$0xff] %v508
        %541 = vst [vmem:[%s137 + $0xc8] sm:$0xff] %v509
        %542 = vst [vmem:[%s137 + $0xd0] sm:$0xff] %v510
        %543 = vst [vmem:[%s137 + $0xd8] sm:$0xff] %v511
        %544 = vst [vmem:[%s137 + $0xe0] sm:$0xff] %v512
        %545 = vst [vmem:[%s137 + $0xe8] sm:$0xff] %v513
        %546 = vst [vmem:[%s137 + $0xf0] sm:$0xff] %v514
        %547 = vst [vmem:[%s137 + $0xf8] sm:$0xff] %v515
        %s548 = sand.u32 %s71, 1
        %s549 = scalar_lea.sflag [#allocation3], %s548
        %s550 = sand.u32 %s71, 1
        %s551 = smul.addr %s550, 256
        %s552 = scalar_lea.vmem [#allocation2], %s551
        // Predicated region
        $region29: #{tpu_custom_call.1} parent=27 // pred_check
          %p553 = pneg %p81
        $region30: #{tpu_custom_call.1} parent=27 // pred_check_branch
          %555 = sbr.rel (%p553) target = $region32
        $region31: #{tpu_custom_call.1} parent=27 // pred_region
          %s556 = smul.u32 32, %s16
          %s558 = ssub.s32 4096, 4096
          %559 = vsyncadd %s549, %s558
          %s560 = smul.addr %s556, 128
          %s561 = scalar_lea.hbm %s2, %s560
          %s562 = sshll.u32 %s552, 4
          %s563 = int_to_ptr.vmem [resolvable:$true] %s562
          %568 = dma.vmem_to_hbm [thread:$0]  %s563, 4096, %s561, %s549, 128, 128, 8
        $region32: #{tpu_custom_call.1} parent=27 // pred_fallthru
          _
      $region28: #{tpu_custom_call.1} parent=5 // pred_fallthru
        _
      %p569 = scmp.le.s32.totalorder 2, %s11
      // Predicated region
      $region33: #{tpu_custom_call.1} parent=5 // pred_check
        %p570 = pneg %p569
      $region34: #{tpu_custom_call.1} parent=5 // pred_check_branch
        %572 = sbr.rel (%p570) target = $region36
      $region35: #{tpu_custom_call.1} parent=5 // pred_region
        %s573 = ssub.s32 %s11, 2
        // Predicated region
        $region37: #{tpu_custom_call.1} parent=35 // pred_check
          %p574 = pneg %p87
        $region38: #{tpu_custom_call.1} parent=35 // pred_check_branch
          %576 = sbr.rel (%p574) target = $region40
        $region39: #{tpu_custom_call.1} parent=35 // pred_region
          %s577 = sand.u32 %s72, 1
          %s578 = scalar_lea.sflag [#allocation3], %s577
          %s579 = sand.u32 %s72, 1
          %s580 = smul.addr %s579, 256
          %s581 = scalar_lea.vmem [#allocation2], %s580
          %582 = dma.done %s578, 4096
        $region40: #{tpu_custom_call.1} parent=35 // pred_fallthru
          _
      $region36: #{tpu_custom_call.1} parent=5 // pred_fallthru
        _
    $region6: #{tpu_custom_call.1} parent=1 // loop_footer
      %s15 = sadd.s32 1, %s11
    $region7: #{tpu_custom_call.1} parent=1 // loop_footer_branch
      %10 = sbr.rel target = $region3
    $region8: #{tpu_custom_call.1} parent=1 // loop_exit
      _
    %583 = vsyncpa [#allocation3], 1
    %s584 = scalar_lea.sflag [#allocation3], 1
    %585 = vsyncpa %s584, 1

</llo_original>
